<compile_context>
chip_gen: v5e
topology: v5e:2x2
jax: 0.10.0
libtpu: 0.0.40
codegen_flags: <defaults>
</compile_context>

<pallas_src>
import functools

import jax
import jax.numpy as jnp
from jax.experimental import pallas as pl
from jax.experimental.pallas import tpu as pltpu


def _round_up(n, m):
    return ((n + m - 1) // m) * m


def _pick_tile(n, max_tile):
    """Largest multiple-of-128 divisor of n (n is a multiple of 128)."""
    t = max(min(n, max_tile) // 128 * 128, 128)
    while n % t != 0:
        t -= 128
    return t


def _device_config():
    """Generation-dependent knobs (safe fallbacks if detection fails)."""
    kind = ""
    try:
        kind = (jax.devices()[0].device_kind or "").lower()
    except Exception:
        pass
    vmem_cap = None
    try:
        vmem_cap = int(pltpu.get_tpu_info().vmem_capacity_bytes)
    except Exception:
        vmem_cap = None
    if not vmem_cap or vmem_cap <= 0:
        vmem_cap = 64 * 1024 * 1024                      # conservative (v7x)

    is_v5_or_older = any(t in kind for t in ("v2", "v3", "v4", "v5"))
    is_v6_plus = any(t in kind for t in ("v6", "v7", "7x"))
    # bf16 EUP exists on v6e/v7x only; keep f32 exp otherwise (correct either way).
    exp_dtype = jnp.bfloat16 if (is_v6_plus and not is_v5_or_older) else jnp.float32
    big_vmem = vmem_cap >= 100 * 1024 * 1024             # v5e / v6e: 128 MiB
    tq_max = 1024 if big_vmem else 512                   # v7x (64 MiB): cap at 512
    vmem_limit = min(int(vmem_cap * 3 // 4), 110 * 1024 * 1024)
    kv_buffers = 3 if is_v5_or_older else 2              # hide DMA on ~820 GB/s v5e
    return exp_dtype, tq_max, vmem_limit, kv_buffers, big_vmem


def _maybe_buffered_spec(shape, index_map, buffers):
    if buffers and buffers > 2:
        try:
            return pl.BlockSpec(shape, index_map, pipeline_mode=pl.Buffered(buffers))
        except Exception:
            pass
    return pl.BlockSpec(shape, index_map)


# ---------------------------------------------------------------------------
# Pass 1: LayerNorm + K/V projection (once per sequence position), bf16 K/V.
# ---------------------------------------------------------------------------
def _kv_project_kernel(x_ref, gamma_ref, wk_ref, wv_ref, ko_ref, vo_ref, *,
                       heads, dim_head, eps):
    gamma = gamma_ref[...]                                   # (C, 1) f32
    xs = x_ref[0]                                            # (C, T)  f32
    mean = jnp.mean(xs, axis=0, keepdims=True)
    var = jnp.mean((xs - mean) ** 2, axis=0, keepdims=True)
    xn = ((xs - mean) * jax.lax.rsqrt(var + eps) * gamma).astype(jnp.bfloat16)
    k = jnp.dot(wk_ref[...], xn, preferred_element_type=jnp.float32)   # (inner, T)
    v = jnp.dot(wv_ref[...], xn, preferred_element_type=jnp.float32)   # (inner, T)
    ko_ref[0] = k.reshape(heads, dim_head, -1).astype(jnp.bfloat16)
    vo_ref[0] = v.reshape(heads, dim_head, -1).astype(jnp.bfloat16)


# ---------------------------------------------------------------------------
# Pass 2: flash attention over the precomputed bf16 K/V stream.
#   grid = (batch, query-tile, kv-tile); kv is the ("arbitrary") reduction axis.
#   Layout: channels / head-dim on sublanes, sequence positions on lanes.
# ---------------------------------------------------------------------------
def _attention_kernel(x_ref, k_ref, v_ref, gamma_ref, wq_ref, wout_ref, o_ref,
                      q_sc, m_sc, l_sc, acc_sc, *,
                      heads, dim_head, eps, n_valid, mask_keys, exp_dtype):
    kv = pl.program_id(2)
    nkv = pl.num_programs(2)
    inner = heads * dim_head

    # ---- once per (batch, query tile): LayerNorm + Q projection + init ----
    @pl.when(kv == 0)
    def _init():
        gamma = gamma_ref[...]                               # (C, 1)
        xs = x_ref[0]                                        # (C, TQ) f32
        mean = jnp.mean(xs, axis=0, keepdims=True)
        var = jnp.mean((xs - mean) ** 2, axis=0, keepdims=True)
        xn = ((xs - mean) * jax.lax.rsqrt(var + eps) * gamma).astype(jnp.bfloat16)
        q = jnp.dot(wq_ref[...], xn,                         # scale folded into Wq
                    preferred_element_type=jnp.float32)      # (inner, TQ)
        q_sc[...] = q.reshape(heads, dim_head, -1).astype(jnp.bfloat16)
        m_sc[...] = jnp.full_like(m_sc, -jnp.inf)
        l_sc[...] = jnp.zeros_like(l_sc)
        acc_sc[...] = jnp.zeros_like(acc_sc)

    # ---- streamed bf16 K/V tile for this kv step ----
    k = k_ref[0]                                             # (heads, d, TK) bf16
    v = v_ref[0]                                             # (heads, d, TK) bf16
    q = q_sc[...]                                            # (heads, d, TQ) bf16

    # Transposed scores s_t[h, j, i] = <k_hj, q_hi>: contracting axis 1 of both
    # operands (batched over heads) materializes no K transpose, and the softmax
    # reductions become cheap sublane reduces with lane-dense (1, TQ) stats.
    s_t = jax.lax.dot_general(
        k, q, dimension_numbers=(((1,), (1,)), ((0,), (0,))),
        preferred_element_type=jnp.float32)                  # (heads, TK, TQ) f32

    if mask_keys:                                            # zero-padded tail keys
        tk = k.shape[-1]
        key_idx = kv * tk + jax.lax.broadcasted_iota(jnp.int32, (1, tk, 1), 1)
        s_t = jnp.where(key_idx < n_valid, s_t, -jnp.inf)

    m_prev = m_sc[...]                                       # (heads, 1, TQ)
    m_new = jnp.maximum(m_prev, jnp.max(s_t, axis=1, keepdims=True))
    alpha = jnp.exp(m_prev - m_new)                          # (heads, 1, TQ) f32
    p_t = jnp.exp((s_t - m_new).astype(exp_dtype))           # (heads, TK, TQ)
    l_sc[...] = alpha * l_sc[...] + jnp.sum(
        p_t.astype(jnp.float32), axis=1, keepdims=True)
    pv = jax.lax.dot_general(
        v, p_t.astype(jnp.bfloat16),
        dimension_numbers=(((2,), (1,)), ((0,), (0,))),
        preferred_element_type=jnp.float32)                  # (heads, d, TQ)
    acc_sc[...] = alpha * acc_sc[...] + pv
    m_sc[...] = m_new

    # ---- once per (batch, query tile): normalize, project out, residual ----
    @pl.when(kv == nkv - 1)
    def _finalize():
        inv_l = pl.reciprocal(l_sc[...], approx=True)        # (heads, 1, TQ)
        out = (acc_sc[...] * inv_l).reshape(inner, -1).astype(jnp.bfloat16)
        y = jnp.dot(wout_ref[...], out,
                    preferred_element_type=jnp.float32)      # (C, TQ)
        o_ref[0] = (y + x_ref[0]).astype(o_ref.dtype)        # pre-norm residual


def attention_forward(x, gamma, wqkv, wout, *, heads, dim_head):
    """x: (B, C, F, H, W) NCDHW float32. Returns same shape/dtype."""
    B, C, Fd, Hd, Wd = x.shape
    N = Fd * Hd * Wd
    inner = heads * dim_head
    scale = dim_head ** (-0.5)
    eps = 1e-5 if x.dtype == jnp.float32 else 1e-3

    exp_dtype, tq_max, vmem_limit, kv_buffers, big_vmem = _device_config()

    # (B, C, F, H, W) -> (B, C, N) is free; pad N to a lane (128) multiple so
    # flash tiling never falls back to a single (N, N) score block.
    N_pad = _round_up(max(N, 128), 128)
    x_seq = x.reshape(B, C, N)
    if N_pad != N:
        x_seq = jnp.pad(x_seq, ((0, 0), (0, 0), (0, N_pad - N)))
    mask_keys = (N_pad != N)

    gamma2 = gamma.reshape(C, 1).astype(jnp.float32)
    # Host-side weight prep: split qkv, fold softmax scale into Wq, cast bf16.
    wq = (wqkv[:inner] * scale).astype(jnp.bfloat16)          # (inner, C)
    wk = wqkv[inner:2 * inner].astype(jnp.bfloat16)           # (inner, C)
    wv = wqkv[2 * inner:].astype(jnp.bfloat16)                # (inner, C)
    wout_b = wout.astype(jnp.bfloat16)                        # (C, inner)

    TK = _pick_tile(N_pad, 512)
    TQ = _pick_tile(N_pad, tq_max)
    # Small-VMEM parts (v7x) have 2 TensorCores: expose >=2 parallel grid points.
    if (not big_vmem) and B * (N_pad // TQ) < 2 and TQ % 256 == 0:
        TQ //= 2
    NQ = N_pad // TQ
    NKV = N_pad // TK

    # ---- pass 1: LayerNorm + K/V projection, bf16 K/V written to HBM ----
    kv_cost = pl.CostEstimate(
        flops=int(4 * B * N_pad * C * inner),
        transcendentals=int(B * N_pad),
        bytes_accessed=int(B * N_pad * (C * 4 + 2 * inner * 2)))

    k_all, v_all = pl.pallas_call(
        functools.partial(_kv_project_kernel, heads=heads, dim_head=dim_head,
                          eps=eps),
        out_shape=(jax.ShapeDtypeStruct((B, heads, dim_head, N_pad), jnp.bfloat16),
                   jax.ShapeDtypeStruct((B, heads, dim_head, N_pad), jnp.bfloat16)),
        grid_spec=pltpu.PrefetchScalarGridSpec(
            num_scalar_prefetch=0,
            grid=(B, NKV),
            in_specs=[
                pl.BlockSpec((1, C, TK), lambda b, t: (b, 0, t)),        # x tile
                pl.BlockSpec((C, 1), lambda b, t: (0, 0)),               # gamma
                pl.BlockSpec((inner, C), lambda b, t: (0, 0)),           # Wk
                pl.BlockSpec((inner, C), lambda b, t: (0, 0)),           # Wv
            ],
            out_specs=[
                pl.BlockSpec((1, heads, dim_head, TK), lambda b, t: (b, 0, 0, t)),
                pl.BlockSpec((1, heads, dim_head, TK), lambda b, t: (b, 0, 0, t)),
            ],
        ),
        compiler_params=pltpu.CompilerParams(
            dimension_semantics=("parallel", "parallel"),
            vmem_limit_bytes=vmem_limit),
        cost_estimate=kv_cost,
    )(x_seq, gamma2, wk, wv)

    # ---- pass 2: flash attention over the bf16 K/V stream ----
    attn_kernel = functools.partial(
        _attention_kernel, heads=heads, dim_head=dim_head, eps=eps,
        n_valid=N, mask_keys=mask_keys, exp_dtype=exp_dtype)

    attn_cost = pl.CostEstimate(
        flops=int(2 * B * N_pad * C * inner                   # Q projection
                  + 4 * B * heads * N_pad * N_pad * dim_head  # QK^T and PV
                  + 2 * B * N_pad * inner * C),               # output projection
        transcendentals=int(B * heads * N_pad * N_pad),
        bytes_accessed=int(B * N_pad * C * 4 * 2              # x in + y out (f32)
                           + 2 * B * NQ * inner * N_pad * 2)) # bf16 K/V streams

    y_seq = pl.pallas_call(
        attn_kernel,
        out_shape=jax.ShapeDtypeStruct((B, C, N_pad), x.dtype),
        grid_spec=pltpu.PrefetchScalarGridSpec(
            num_scalar_prefetch=0,
            grid=(B, NQ, NKV),
            in_specs=[
                pl.BlockSpec((1, C, TQ), lambda b, qi, kv: (b, 0, qi)),  # x (resid+Q)
                _maybe_buffered_spec((1, heads, dim_head, TK),
                                     lambda b, qi, kv: (b, 0, 0, kv),
                                     kv_buffers),                        # K (bf16)
                _maybe_buffered_spec((1, heads, dim_head, TK),
                                     lambda b, qi, kv: (b, 0, 0, kv),
                                     kv_buffers),                        # V (bf16)
                pl.BlockSpec((C, 1), lambda b, qi, kv: (0, 0)),          # gamma
                pl.BlockSpec((inner, C), lambda b, qi, kv: (0, 0)),      # Wq (scaled)
                pl.BlockSpec((C, inner), lambda b, qi, kv: (0, 0)),      # Wout
            ],
            out_specs=pl.BlockSpec((1, C, TQ), lambda b, qi, kv: (b, 0, qi)),
            scratch_shapes=[
                pltpu.VMEM((heads, dim_head, TQ), jnp.bfloat16),  # Q tile
                pltpu.VMEM((heads, 1, TQ), jnp.float32),          # running max
                pltpu.VMEM((heads, 1, TQ), jnp.float32),          # running sum
                pltpu.VMEM((heads, dim_head, TQ), jnp.float32),   # P@V accumulator
            ],
        ),
        compiler_params=pltpu.CompilerParams(
            dimension_semantics=("parallel", "parallel", "arbitrary"),
            vmem_limit_bytes=vmem_limit),
        cost_estimate=attn_cost,
    )(x_seq, k_all, v_all, gamma2, wq, wout_b)

    if N_pad != N:
        y_seq = y_seq[:, :, :N]
    return y_seq.reshape(B, C, Fd, Hd, Wd)


def attention_reference(x, gamma, wqkv, wout, *, heads, dim_head):
    """Pure-JAX (f32) reference matching the PyTorch module semantics."""
    B, C, Fd, Hd, Wd = x.shape
    eps = 1e-5 if x.dtype == jnp.float32 else 1e-3
    scale = dim_head ** (-0.5)
    inner = heads * dim_head

    mean = x.mean(axis=1, keepdims=True)
    var = ((x - mean) ** 2).mean(axis=1, keepdims=True)
    xn = (x - mean) / jnp.sqrt(var + eps) * gamma.reshape(1, C, 1, 1, 1)

    qkv = jnp.einsum('bcfhw,oc->bofhw', xn, wqkv)
    q, k, v = (qkv[:, :inner], qkv[:, inner:2 * inner], qkv[:, 2 * inner:])

    def rearr(t):  # b (h c) f x y -> b h (f x y) c
        return t.reshape(B, heads, dim_head, Fd * Hd * Wd).transpose(0, 1, 3, 2)

    q, k, v = map(rearr, (q, k, v))
    q = q * scale
    sim = jnp.einsum('bhid,bhjd->bhij', q, k)
    attn = jax.nn.softmax(sim, axis=-1)
    out = jnp.einsum('bhij,bhjd->bhid', attn, v)
    out = out.transpose(0, 1, 3, 2).reshape(B, inner, Fd, Hd, Wd)
    y = jnp.einsum('bcfhw,oc->bofhw', out, wout)
    return y + x


if __name__ == "__main__":
    # Small shapes consistent with the module (N = 4*4*4 = 64 exercises padding).
    B, dim, Fd, Hd, Wd = 2, 4, 4, 4, 4
    heads, dim_head = 2, 8
    inner = heads * dim_head

    key = jax.random.PRNGKey(0)
    kx, kg, kq, ko = jax.random.split(key, 4)

    x = jax.random.normal(kx, (B, dim, Fd, Hd, Wd), dtype=jnp.float32)
    gamma = 1.0 + 0.1 * jax.random.normal(kg, (dim,), jnp.float32)      # LayerNorm gamma
    wqkv = 0.2 * jax.random.normal(kq, (3 * inner, dim), jnp.float32)   # to_qkv 1x1x1 conv
    wout = 0.2 * jax.random.normal(ko, (dim, inner), jnp.float32)       # to_out 1x1x1 conv

    y = attention_forward(x, gamma, wqkv, wout, heads=heads, dim_head=dim_head)
    y = jax.block_until_ready(y)

    y_ref = attention_reference(x, gamma, wqkv, wout, heads=heads, dim_head=dim_head)
    assert y.shape == x.shape and y.dtype == x.dtype
    max_err = float(jnp.max(jnp.abs(y - y_ref)))
    # bf16 MXU operands (+ optional bf16 exp, approx reciprocal) vs pure-f32 ref.
    assert max_err < 3e-2, f"mismatch vs reference: max abs err {max_err}"

    print("KERNEL_OK")
</pallas_src>

<mosaic_0001>
module attributes {stable_mosaic.version = 11 : i64} {
  func.func @_kv_project_kernel(%arg0: i32, %arg1: i32, %arg2: memref<1x4x128xf32, #tpu.memory_space<vmem>>, %arg3: memref<4x1xf32, #tpu.memory_space<vmem>>, %arg4: memref<16x4xbf16, #tpu.memory_space<vmem>>, %arg5: memref<16x4xbf16, #tpu.memory_space<vmem>>, %arg6: memref<1x2x8x128xbf16, #tpu.memory_space<vmem>>, %arg7: memref<1x2x8x128xbf16, #tpu.memory_space<vmem>>) attributes {dimension_semantics = [#tpu.dimension_semantics<parallel>, #tpu.dimension_semantics<parallel>], iteration_bounds = array<i64: 2, 1>, scalar_prefetch = 0 : i64, scratch_operands = 0 : i64, tpu.core_type = #tpu.core_type<tc>, window_params = [{transform_indices = @transform_0, window_bounds = array<i64: 1, 4, 128>}, {pipeline_mode = #tpu.pipeline_mode<synchronous>, transform_indices = @transform_1, window_bounds = array<i64: 4, 1>}, {pipeline_mode = #tpu.pipeline_mode<synchronous>, transform_indices = @transform_2, window_bounds = array<i64: 16, 4>}, {pipeline_mode = #tpu.pipeline_mode<synchronous>, transform_indices = @transform_3, window_bounds = array<i64: 16, 4>}, {transform_indices = @transform_4, window_bounds = array<i64: 1, 2, 8, 128>}, {transform_indices = @transform_5, window_bounds = array<i64: 1, 2, 8, 128>}]} {
    %c0 = arith.constant 0 : index
    %c0_0 = arith.constant 0 : index
    %0 = vector.load %arg3[%c0, %c0_0] : memref<4x1xf32, #tpu.memory_space<vmem>>, vector<4x1xf32>
    %c0_1 = arith.constant 0 : index
    %c0_2 = arith.constant 0 : index
    %c0_3 = arith.constant 0 : index
    %1 = vector.load %arg2[%c0_1, %c0_2, %c0_3] : memref<1x4x128xf32, #tpu.memory_space<vmem>>, vector<1x4x128xf32>
    %2 = vector.shape_cast %1 : vector<1x4x128xf32> to vector<4x128xf32>
    %cst = arith.constant dense<0.000000e+00> : vector<128xf32>
    %3 = vector.multi_reduction <add>, %2, %cst [0] : vector<4x128xf32> to vector<128xf32>
    %4 = vector.shape_cast %3 : vector<128xf32> to vector<1x128xf32>
    %cst_4 = arith.constant 4.000000e+00 : f32
    %5 = vector.broadcast %cst_4 : f32 to vector<1x128xf32>
    %6 = arith.divf %4, %5 : vector<1x128xf32>
    %7 = vector.broadcast %6 : vector<1x128xf32> to vector<4x128xf32>
    %8 = arith.subf %2, %7 : vector<4x128xf32>
    %9 = arith.mulf %8, %8 : vector<4x128xf32>
    %cst_5 = arith.constant dense<0.000000e+00> : vector<128xf32>
    %10 = vector.multi_reduction <add>, %9, %cst_5 [0] : vector<4x128xf32> to vector<128xf32>
    %11 = vector.shape_cast %10 : vector<128xf32> to vector<1x128xf32>
    %cst_6 = arith.constant 4.000000e+00 : f32
    %12 = vector.broadcast %cst_6 : f32 to vector<1x128xf32>
    %13 = arith.divf %11, %12 : vector<1x128xf32>
    %14 = vector.broadcast %6 : vector<1x128xf32> to vector<4x128xf32>
    %15 = arith.subf %2, %14 : vector<4x128xf32>
    %cst_7 = arith.constant 9.99999974E-6 : f32
    %16 = vector.broadcast %cst_7 : f32 to vector<1x128xf32>
    %17 = arith.addf %13, %16 : vector<1x128xf32>
    %18 = math.rsqrt %17 : vector<1x128xf32>
    %19 = vector.broadcast %18 : vector<1x128xf32> to vector<4x128xf32>
    %20 = arith.mulf %15, %19 : vector<4x128xf32>
    %21 = vector.broadcast %0 : vector<4x1xf32> to vector<4x128xf32>
    %22 = arith.mulf %20, %21 : vector<4x128xf32>
    %23 = arith.truncf %22 : vector<4x128xf32> to vector<4x128xbf16>
    %c0_8 = arith.constant 0 : index
    %c0_9 = arith.constant 0 : index
    %24 = vector.load %arg4[%c0_8, %c0_9] : memref<16x4xbf16, #tpu.memory_space<vmem>>, vector<16x4xbf16>
    %cst_10 = arith.constant dense<0.000000e+00> : vector<16x128xf32>
    %25 = tpu.matmul %24, %23, %cst_10 {dimension_numbers = #tpu.dot_dimension_numbers<[1], [0], [0], [1], [0, 0, 1, 1], [], []>} : vector<16x4xbf16>, vector<4x128xbf16>, vector<16x128xf32> -> vector<16x128xf32>
    %c0_11 = arith.constant 0 : index
    %c0_12 = arith.constant 0 : index
    %26 = vector.load %arg5[%c0_11, %c0_12] : memref<16x4xbf16, #tpu.memory_space<vmem>>, vector<16x4xbf16>
    %cst_13 = arith.constant dense<0.000000e+00> : vector<16x128xf32>
    %27 = tpu.matmul %26, %23, %cst_13 {dimension_numbers = #tpu.dot_dimension_numbers<[1], [0], [0], [1], [0, 0, 1, 1], [], []>} : vector<16x4xbf16>, vector<4x128xbf16>, vector<16x128xf32> -> vector<16x128xf32>
    %28 = vector.shape_cast %25 : vector<16x128xf32> to vector<2x8x128xf32>
    %29 = arith.truncf %28 : vector<2x8x128xf32> to vector<2x8x128xbf16>
    %c0_14 = arith.constant 0 : index
    %c0_15 = arith.constant 0 : index
    %c0_16 = arith.constant 0 : index
    %c0_17 = arith.constant 0 : index
    %30 = vector.load %arg6[%c0_14, %c0_15, %c0_16, %c0_17] : memref<1x2x8x128xbf16, #tpu.memory_space<vmem>>, vector<1x2x8x128xbf16>
    %31 = vector.shape_cast %30 : vector<1x2x8x128xbf16> to vector<2x8x128xbf16>
    %32 = vector.shape_cast %29 : vector<2x8x128xbf16> to vector<1x2x8x128xbf16>
    tpu.vector_store %arg6[%c0_14, %c0_15, %c0_16, %c0_17], %32 {strides = array<i32>} : memref<1x2x8x128xbf16, #tpu.memory_space<vmem>>, vector<1x2x8x128xbf16>,
    %33 = vector.shape_cast %27 : vector<16x128xf32> to vector<2x8x128xf32>
    %34 = arith.truncf %33 : vector<2x8x128xf32> to vector<2x8x128xbf16>
    %c0_18 = arith.constant 0 : index
    %c0_19 = arith.constant 0 : index
    %c0_20 = arith.constant 0 : index
    %c0_21 = arith.constant 0 : index
    %35 = vector.load %arg7[%c0_18, %c0_19, %c0_20, %c0_21] : memref<1x2x8x128xbf16, #tpu.memory_space<vmem>>, vector<1x2x8x128xbf16>
    %36 = vector.shape_cast %35 : vector<1x2x8x128xbf16> to vector<2x8x128xbf16>
    %37 = vector.shape_cast %34 : vector<2x8x128xbf16> to vector<1x2x8x128xbf16>
    tpu.vector_store %arg7[%c0_18, %c0_19, %c0_20, %c0_21], %37 {strides = array<i32>} : memref<1x2x8x128xbf16, #tpu.memory_space<vmem>>, vector<1x2x8x128xbf16>,
    return
  }
  func.func @transform_0(%arg0: i32, %arg1: i32) -> (i32, i32, i32) {
    %c0_i32 = arith.constant 0 : i32
    %c0_i32_0 = arith.constant 0 : i32
    return %arg0, %c0_i32, %arg1 : i32, i32, i32
  }
  func.func @transform_1(%arg0: i32, %arg1: i32) -> (i32, i32) {
    %c0_i32 = arith.constant 0 : i32
    %c0_i32_0 = arith.constant 0 : i32
    %c0_i32_1 = arith.constant 0 : i32
    return %c0_i32, %c0_i32_0 : i32, i32
  }
  func.func @transform_2(%arg0: i32, %arg1: i32) -> (i32, i32) {
    %c0_i32 = arith.constant 0 : i32
    %c0_i32_0 = arith.constant 0 : i32
    %c0_i32_1 = arith.constant 0 : i32
    return %c0_i32, %c0_i32_0 : i32, i32
  }
  func.func @transform_3(%arg0: i32, %arg1: i32) -> (i32, i32) {
    %c0_i32 = arith.constant 0 : i32
    %c0_i32_0 = arith.constant 0 : i32
    %c0_i32_1 = arith.constant 0 : i32
    return %c0_i32, %c0_i32_0 : i32, i32
  }
  func.func @transform_4(%arg0: i32, %arg1: i32) -> (i32, i32, i32, i32) {
    %c0_i32 = arith.constant 0 : i32
    %c0_i32_0 = arith.constant 0 : i32
    %c0_i32_1 = arith.constant 0 : i32
    return %arg0, %c0_i32, %c0_i32_0, %arg1 : i32, i32, i32, i32
  }
  func.func @transform_5(%arg0: i32, %arg1: i32) -> (i32, i32, i32, i32) {
    %c0_i32 = arith.constant 0 : i32
    %c0_i32_0 = arith.constant 0 : i32
    %c0_i32_1 = arith.constant 0 : i32
    return %arg0, %c0_i32, %c0_i32_0, %arg1 : i32, i32, i32, i32
  }
}

</mosaic_0001>

<llo_original>
// kernel: tpu_custom_call.1
$region0: #{tpu_custom_call.1}
  #allocation0 [shape = 'u32[]', space=smem, size = 0x4, offset = 0x4, fixed_abs, tag = 'smem constant byte address 0x4 - core index']
  #allocation1 [shape = 'u32[72,128]{1,0:T(1,128)}', space=vmem, size = 0x9000, scoped, tag = 'internal scratch']
  %s0 = inlined_call_operand.vmem [shape: f32[2,4,128], index: 0, kind: input, shape index: {}]
  %s1 = inlined_call_operand.vmem [shape: f32[4,1], index: 1, kind: input, shape index: {}]
  %s2 = inlined_call_operand.vmem [shape: bf16[16,4], index: 2, kind: input, shape index: {}]
  %s3 = inlined_call_operand.vmem [shape: bf16[16,4], index: 3, kind: input, shape index: {}]
  %s4 = inlined_call_operand.hbm [shape: bf16[2,2,8,128], index: 4, kind: output, shape index: {0}]
  %s5 = inlined_call_operand.hbm [shape: bf16[2,2,8,128], index: 5, kind: output, shape index: {1}]
  %6 = xla_tuple %s4, %s5
  %s7 = sld [smem:[#allocation0]]
  $region57: #{tpu_custom_call.1} parent=0
    _
  %s9 = ssub.s32 1, %s7
  %s10 = scalar_select 0, %s9, %s7
  $region1: #{tpu_custom_call.1} parent=0
    #allocation2 [shape = 'u8[8192]{0}', space=vmem, size = 0x2000, scoped, tag = 'output window, operand 0']
    #allocation3 [shape = 's32[2]{0}', space=sflag, size = 0x8, scoped, tag = 'scoped memory for tpu_custom_call.1']
    #allocation4 [shape = 'u8[8192]{0}', space=vmem, size = 0x2000, scoped, tag = 'output window, operand 1']
    #allocation5 [shape = 's32[2]{0}', space=sflag, size = 0x8, scoped, tag = 'scoped memory for tpu_custom_call.1']
    %11 = vsyncpa [#allocation3], 0
    %s12 = scalar_lea.sflag [#allocation3], 1
    %13 = vsyncpa %s12, 0
    %14 = vsyncpa [#allocation5], 0
    %s15 = scalar_lea.sflag [#allocation5], 1
    %16 = vsyncpa %s15, 0
    loop: start=0, step=1, limit=4
    $region2: #{tpu_custom_call.1} parent=1 // loop_pre_header
      _
    $region3: #{tpu_custom_call.1} parent=1 // loop_header
      %s18 = sphi 0, %s22
      %p19 = scmp.ge.s32.totalorder %s18, 4
      %s25 = sphi 0, %s37
      %s26 = sphi 0, %s33
      %s27 = sphi 0, %s25
      %s28 = sphi 0, %s26
      %s29 = sphi 0, %s27
      %s30 = sphi 0, %s28
      %s42 = sphi 0, %s44
      %s45 = sphi 0, %s42
      %s46 = sphi 0, %s45
      %s62 = sphi 0, %s46
      %s66 = sphi 0, %s66
      %s68 = sphi 0, %s66
      %s69 = sphi 0, %s68
      %s83 = sphi 0, %s69
      %s87 = sphi 0, %s87
      %s89 = sphi 0, %s87
      %s90 = sphi 0, %s89
      %s104 = sphi 0, %s90
      %s108 = sphi 0, %s108
      %s110 = sphi 0, %s108
      %s111 = sphi 0, %s110
      %s125 = sphi 0, %s111
      %s133 = sphi 0, %s135
      %s136 = sphi 0, %s133
      %s137 = sphi 0, %s136
      %s153 = sphi 0, %s137
      %s161 = sphi 0, %s163
      %s164 = sphi 0, %s161
      %s165 = sphi 0, %s164
      %s181 = sphi 0, %s165
    $region4: #{tpu_custom_call.1} parent=1 // loop_header_branch
      %21 = sbr.rel (%p19) target = $region8
    $region5: #{tpu_custom_call.1} parent=1 // loop_body
      %s23 = ssub.s32 %s18, 1
      %s24 = ssub.s32 %s18, 2
      %s31 = sadd.s32 1, %s26
      %p32 = scmp.ge.s32.totalorder %s31, 1
      %s33 = scalar_select %p32, 0, %s31
      %s34 = sadd.s32 1, %s25
      %s35 = scalar_select %p32, %s34, %s25
      %p36 = scmp.ge.s32.totalorder %s35, 2
      %s37 = scalar_select %p36, 0, %s35
      %s38 = ssub.s32 %s25, %s37
      %s39 = ssub.s32 %s26, %s33
      %s40 = sor.u32 %s38, %s39
      %p41 = scmp.eq.s32.totalorder %s40, 0
      %s43 = sadd.s32 %s42, 1
      %s44 = scalar_select %p41, %s42, %s43
      %p47 = pneg %p41
      %p48 = scmp.eq.s32.totalorder %s18, 1
      %p49 = por %p47, %p48
      %p50 = scmp.ne.s32.totalorder %s42, %s45
      %p51 = scmp.eq.s32.totalorder %s18, 0
      %p52 = por %p50, %p51
      %p53 = scmp.ne.s32.totalorder %s42, %s45
      %p54 = scmp.eq.s32.totalorder %s23, 1
      %p55 = por %p53, %p54
      %p56 = scmp.ne.s32.totalorder %s45, %s46
      %p57 = scmp.eq.s32.totalorder %s23, 0
      %p58 = por %p56, %p57
      %p59 = scmp.ne.s32.totalorder %s45, %s46
      %p60 = scmp.eq.s32.totalorder %s24, 1
      %p61 = por %p59, %p60
      %p63 = scmp.ne.s32.totalorder %s46, %s62
      %p64 = scmp.eq.s32.totalorder %s24, 0
      %p65 = por %p63, %p64
      %s67 = sadd.s32 %s66, 1
      %p70 = scmp.eq.s32.totalorder %s18, 1
      %p71 = scmp.ne.s32.totalorder %s66, %s68
      %p72 = scmp.eq.s32.totalorder %s18, 0
      %p73 = por %p71, %p72
      %p74 = scmp.ne.s32.totalorder %s66, %s68
      %p75 = scmp.eq.s32.totalorder %s23, 1
      %p76 = por %p74, %p75
      %p77 = scmp.ne.s32.totalorder %s68, %s69
      %p78 = scmp.eq.s32.totalorder %s23, 0
      %p79 = por %p77, %p78
      %p80 = scmp.ne.s32.totalorder %s68, %s69
      %p81 = scmp.eq.s32.totalorder %s24, 1
      %p82 = por %p80, %p81
      %p84 = scmp.ne.s32.totalorder %s69, %s83
      %p85 = scmp.eq.s32.totalorder %s24, 0
      %p86 = por %p84, %p85
      %s88 = sadd.s32 %s87, 1
      %p91 = scmp.eq.s32.totalorder %s18, 1
      %p92 = scmp.ne.s32.totalorder %s87, %s89
      %p93 = scmp.eq.s32.totalorder %s18, 0
      %p94 = por %p92, %p93
      %p95 = scmp.ne.s32.totalorder %s87, %s89
      %p96 = scmp.eq.s32.totalorder %s23, 1
      %p97 = por %p95, %p96
      %p98 = scmp.ne.s32.totalorder %s89, %s90
      %p99 = scmp.eq.s32.totalorder %s23, 0
      %p100 = por %p98, %p99
      %p101 = scmp.ne.s32.totalorder %s89, %s90
      %p102 = scmp.eq.s32.totalorder %s24, 1
      %p103 = por %p101, %p102
      %p105 = scmp.ne.s32.totalorder %s90, %s104
      %p106 = scmp.eq.s32.totalorder %s24, 0
      %p107 = por %p105, %p106
      %s109 = sadd.s32 %s108, 1
      %p112 = scmp.eq.s32.totalorder %s18, 1
      %p113 = scmp.ne.s32.totalorder %s108, %s110
      %p114 = scmp.eq.s32.totalorder %s18, 0
      %p115 = por %p113, %p114
      %p116 = scmp.ne.s32.totalorder %s108, %s110
      %p117 = scmp.eq.s32.totalorder %s23, 1
      %p118 = por %p116, %p117
      %p119 = scmp.ne.s32.totalorder %s110, %s111
      %p120 = scmp.eq.s32.totalorder %s23, 0
      %p121 = por %p119, %p120
      %p122 = scmp.ne.s32.totalorder %s110, %s111
      %p123 = scmp.eq.s32.totalorder %s24, 1
      %p124 = por %p122, %p123
      %p126 = scmp.ne.s32.totalorder %s111, %s125
      %p127 = scmp.eq.s32.totalorder %s24, 0
      %p128 = por %p126, %p127
      %s129 = ssub.s32 %s25, %s37
      %s130 = ssub.s32 %s26, %s33
      %s131 = sor.u32 %s129, %s130
      %p132 = scmp.eq.s32.totalorder %s131, 0
      %s134 = sadd.s32 %s133, 1
      %s135 = scalar_select %p132, %s133, %s134
      %p138 = pneg %p132
      %p139 = scmp.eq.s32.totalorder %s18, 1
      %p140 = por %p138, %p139
      %p141 = scmp.ne.s32.totalorder %s133, %s136
      %p142 = scmp.eq.s32.totalorder %s18, 0
      %p143 = por %p141, %p142
      %p144 = scmp.ne.s32.totalorder %s133, %s136
      %p145 = scmp.eq.s32.totalorder %s23, 1
      %p146 = por %p144, %p145
      %p147 = scmp.ne.s32.totalorder %s136, %s137
      %p148 = scmp.eq.s32.totalorder %s23, 0
      %p149 = por %p147, %p148
      %p150 = scmp.ne.s32.totalorder %s136, %s137
      %p151 = scmp.eq.s32.totalorder %s24, 1
      %p152 = por %p150, %p151
      %p154 = scmp.ne.s32.totalorder %s137, %s153
      %p155 = scmp.eq.s32.totalorder %s24, 0
      %p156 = por %p154, %p155
      %s157 = ssub.s32 %s25, %s37
      %s158 = ssub.s32 %s26, %s33
      %s159 = sor.u32 %s157, %s158
      %p160 = scmp.eq.s32.totalorder %s159, 0
      %s162 = sadd.s32 %s161, 1
      %s163 = scalar_select %p160, %s161, %s162
      %p166 = pneg %p160
      %p167 = scmp.eq.s32.totalorder %s18, 1
      %p168 = por %p166, %p167
      %p169 = scmp.ne.s32.totalorder %s161, %s164
      %p170 = scmp.eq.s32.totalorder %s18, 0
      %p171 = por %p169, %p170
      %p172 = scmp.ne.s32.totalorder %s161, %s164
      %p173 = scmp.eq.s32.totalorder %s23, 1
      %p174 = por %p172, %p173
      %p175 = scmp.ne.s32.totalorder %s164, %s165
      %p176 = scmp.eq.s32.totalorder %s23, 0
      %p177 = por %p175, %p176
      %p178 = scmp.ne.s32.totalorder %s164, %s165
      %p179 = scmp.eq.s32.totalorder %s24, 1
      %p180 = por %p178, %p179
      %p182 = scmp.ne.s32.totalorder %s165, %s181
      %p183 = scmp.eq.s32.totalorder %s24, 0
      %p184 = por %p182, %p183
      %p185 = scmp.le.s32.totalorder 1, %s18
      %p186 = scmp.lt.s32.totalorder %s18, 3
      %p187 = pnand %p185, %p186
      %p188 = pneg %p187
      // Predicated region
      $region9: #{tpu_custom_call.1} parent=5 // pred_check
        _
      $region10: #{tpu_custom_call.1} parent=5 // pred_check_branch
        %190 = sbr.rel (%p187) target = $region12
      $region11: #{tpu_custom_call.1} parent=5 // pred_region
        %s191 = ssub.s32 %s18, 1
        // Predicated region
        $region13: #{tpu_custom_call.1} parent=11 // pred_check
          %p192 = pneg %p79
        $region14: #{tpu_custom_call.1} parent=11 // pred_check_branch
          %194 = sbr.rel (%p192) target = $region16
        $region15: #{tpu_custom_call.1} parent=11 // pred_region
          _
        $region16: #{tpu_custom_call.1} parent=11 // pred_fallthru
          _
        // Predicated region
        $region17: #{tpu_custom_call.1} parent=11 // pred_check
          %p195 = pneg %p100
        $region18: #{tpu_custom_call.1} parent=11 // pred_check_branch
          %197 = sbr.rel (%p195) target = $region20
        $region19: #{tpu_custom_call.1} parent=11 // pred_region
          _
        $region20: #{tpu_custom_call.1} parent=11 // pred_fallthru
          _
        // Predicated region
        $region21: #{tpu_custom_call.1} parent=11 // pred_check
          %p198 = pneg %p121
        $region22: #{tpu_custom_call.1} parent=11 // pred_check_branch
          %200 = sbr.rel (%p198) target = $region24
        $region23: #{tpu_custom_call.1} parent=11 // pred_region
          _
        $region24: #{tpu_custom_call.1} parent=11 // pred_fallthru
          _
      $region12: #{tpu_custom_call.1} parent=5 // pred_fallthru
        _
      %p201 = scmp.lt.s32.totalorder %s18, 2
      // Predicated region
      $region25: #{tpu_custom_call.1} parent=5 // pred_check
        %p202 = pneg %p201
      $region26: #{tpu_custom_call.1} parent=5 // pred_check_branch
        %204 = sbr.rel (%p202) target = $region28
      $region27: #{tpu_custom_call.1} parent=5 // pred_region
        // Predicated region
        $region29: #{tpu_custom_call.1} parent=27 // pred_check
          %p205 = pneg %p52
        $region30: #{tpu_custom_call.1} parent=27 // pred_check_branch
          %207 = sbr.rel (%p205) target = $region32
        $region31: #{tpu_custom_call.1} parent=27 // pred_region
          %p208 = scmp.lt.s32.totalorder %s25, 1
          %s209 = scalar_select %p208, %s25, 1
          %p210 = scmp.lt.s32.totalorder %s26, 0
          %s211 = scalar_select %p210, %s26, 0
          %s212 = sadd.s32 %s211, %s209
          %s213 = smul.addr %s212, 4
          %s214 = scalar_lea.vmem %s0, %s213
        $region32: #{tpu_custom_call.1} parent=27 // pred_fallthru
          _
      $region28: #{tpu_custom_call.1} parent=5 // pred_fallthru
        _
      %p215 = scmp.le.s32.totalorder 1, %s18
      %p216 = scmp.lt.s32.totalorder %s18, 3
      %p217 = pnand %p215, %p216
      %p218 = pneg %p217
      // Predicated region
      $region33: #{tpu_custom_call.1} parent=5 // pred_check
        _
      $region34: #{tpu_custom_call.1} parent=5 // pred_check_branch
        %220 = sbr.rel (%p217) target = $region36
      $region35: #{tpu_custom_call.1} parent=5 // pred_region
        %s221 = ssub.s32 %s18, 1
        %p222 = scmp.lt.s32.totalorder %s27, 1
        %s223 = scalar_select %p222, %s27, 1
        %p224 = scmp.lt.s32.totalorder %s28, 0
        %s225 = scalar_select %p224, %s28, 0
        %s226 = sadd.s32 %s225, %s223
        %s227 = smul.addr %s226, 4
        %s228 = scalar_lea.vmem %s0, %s227
        %p229 = pneg %p58
        %p230 = pneg %p55
        %p231 = pneg %p79
        %p232 = pneg %p76
        %p233 = pneg %p100
        %p234 = pneg %p97
        %p235 = pneg %p121
        %p236 = pneg %p118
        %p237 = pneg %p149
        %p238 = pneg %p146
        %s239 = sand.u32 %s136, 1
        %s240 = scalar_lea.sflag [#allocation3], %s239
        %s241 = sand.u32 %s136, 1
        %s242 = smul.addr %s241, 8
        %s243 = scalar_lea.vmem [#allocation2], %s242
        %p244 = pneg %p177
        %p245 = pneg %p174
        %s246 = sand.u32 %s164, 1
        %s247 = scalar_lea.sflag [#allocation5], %s246
        %s248 = sand.u32 %s164, 1
        %s249 = smul.addr %s248, 8
        %s250 = scalar_lea.vmem [#allocation4], %s249
        %p251 = scmp.lt.s32.totalorder %s27, 1
        %s252 = scalar_select %p251, %s27, 1
        %p253 = scmp.lt.s32.totalorder %s28, 0
        %s254 = scalar_select %p253, %s28, 0
        %s255 = sadd.s32 %s254, %s252
        %s256 = smul.addr %s255, 4
        %s257 = scalar_lea.vmem %s0, %s256
        %v259 = vld [vmem:[%s1] sm:$0xf]
        %v260 = vld [vmem:[%s257] sm:$0xf]
        %vm261 = vcmask 1043456
        %v262 = vsel %vm261, %v260, 0.0
        %v263 = vrot.slane %v262, 4
        %v264 = vadd.f32 %v262, %v263
        %v265 = vrot.slane %v264, 2
        %v266 = vadd.f32 %v264, %v265
        %v267 = vrot.slane %v266, 1
        %v268 = vadd.f32 %v266, %v267
        %v269 = vrcp.pop 4.0
        %v270 = vmul.f32 4.0, %v269
        %v271 = vsub.f32 1.0, %v270
        %v272 = vmul.f32 %v269, %v271
        %v273 = vadd.f32 %v269, %v272
        %vm274 = vweird.f32 %v269
        %v275 = vsel %vm274, %v269, %v273
        %v276 = vmul.f32 %v268, %v275
        %v277 = vsub.f32 %v260, %v276
        %v278 = vmul.f32 %v277, %v277
        %v279 = vsel %vm261, %v278, 0.0
        %v280 = vrot.slane %v279, 4
        %v281 = vadd.f32 %v279, %v280
        %v282 = vrot.slane %v281, 2
        %v283 = vadd.f32 %v281, %v282
        %v284 = vrot.slane %v283, 1
        %v285 = vadd.f32 %v283, %v284
        %v286 = vmul.f32 %v285, %v275
        %v287 = vadd.f32 %v286, 1e-05
        %v288 = vrsqrt.pop %v287
        %v289 = vmul.f32 %v288, %v287
        %v290 = vmul.f32 %v289, %v288
        %v291 = vmul.f32 0.5, %v290
        %v292 = vsub.f32 1.5, %v291
        %v293 = vmul.f32 %v288, %v292
        %vm294 = vweird.f32 %v287
        %vm295 = vweird.f32 %v288
        %vm296 = vmor %vm294, %vm295
        %v297 = vsel %vm296, %v288, %v293
        %v298 = vmul.f32 %v277, %v297
        %300 = vset.pattern.permute.xlu0 0
        %301 = vperm.xlu0 %300, %v259
        %v302 = vpop.permute.xlu0 %301
        %v304 = vmul.f32 %v298, %v302
        %v305 = vpack.c.bf16 %v304, %v304
        %v306 = vld [vmem:[%s2] sm:$0xf]
        %v307 = vld [vmem:[%s2 + $0x4] sm:$0xf]
        %v310 = vunpack.c.l.b16 %v306
        %v311 = vunpack.c.l.b16 %v307
        %v312 = vpack.c.b16 %v311, %v310
        %vm313 = vcmask 31744
        %v315 = vsel %vm313, %v312, 0
        %vm317 = vcmask 1041408
        %v319 = vsel %vm317, %v305, 0
        %321 = vmatpush.bf16.msra.mxu0 0
        %322 = vmatpush.bf16.msra.mxu0 0
        %323 = vmatpush.bf16.msra.mxu0 0
        %324 = vmatpush.bf16.msra.mxu0 0
        %325 = vmatpush.bf16.msra.mxu0 0
        %326 = vmatpush.bf16.msra.mxu0 0
        %327 = vmatpush.bf16.msra.mxu0 0
        %328 = vmatpush.bf16.msra.mxu0 %v319
        %329 = vmatmul.bf16.gmra.mxu0 %v315
        %v330 = vpop.f32.mrf.mxu0
        %v331 = vadd.f32 0.0, %v330
        %v332 = vpop.f32.mrf.mxu0
        %v333 = vadd.f32 0.0, %v332
        %334 = vdwg.mxu0
        %v335 = vld [vmem:[%s3] sm:$0xf]
        %v336 = vld [vmem:[%s3 + $0x4] sm:$0xf]
        %v339 = vunpack.c.l.b16 %v335
        %v340 = vunpack.c.l.b16 %v336
        %v341 = vpack.c.b16 %v340, %v339
        %v343 = vsel %vm313, %v341, 0
        %345 = vmatpush.bf16.msra.mxu0 0
        %346 = vmatpush.bf16.msra.mxu0 0
        %347 = vmatpush.bf16.msra.mxu0 0
        %348 = vmatpush.bf16.msra.mxu0 0
        %349 = vmatpush.bf16.msra.mxu0 0
        %350 = vmatpush.bf16.msra.mxu0 0
        %351 = vmatpush.bf16.msra.mxu0 0
        %352 = vmatpush.bf16.msra.mxu0 %v319
        %353 = vmatmul.bf16.gmra.mxu0 %v343
        %v354 = vpop.f32.mrf.mxu0
        %v355 = vadd.f32 0.0, %v354
        %v356 = vpop.f32.mrf.mxu0
        %v357 = vadd.f32 0.0, %v356
        %358 = vdwg.mxu0
        %v359 = vpack.c.bf16 %v331, %v331
        %v360 = vpack.c.bf16 %v333, %v333
        %361 = vst [vmem:[%s243] sm:$0xf] %v359
        %362 = vst [vmem:[%s243 + $0x4] sm:$0xf] %v360
        %v363 = vpack.c.bf16 %v355, %v355
        %v364 = vpack.c.bf16 %v357, %v357
        %365 = vst [vmem:[%s250] sm:$0xf] %v363
        %366 = vst [vmem:[%s250 + $0x4] sm:$0xf] %v364
        %s367 = sand.u32 %s136, 1
        %s368 = scalar_lea.sflag [#allocation3], %s367
        %s369 = sand.u32 %s136, 1
        %s370 = smul.addr %s369, 8
        %s371 = scalar_lea.vmem [#allocation2], %s370
        %s372 = sand.u32 %s164, 1
        %s373 = scalar_lea.sflag [#allocation5], %s372
        %s374 = sand.u32 %s164, 1
        %s375 = smul.addr %s374, 8
        %s376 = scalar_lea.vmem [#allocation4], %s375
        // Predicated region
        $region37: #{tpu_custom_call.1} parent=35 // pred_check
          %p377 = pneg %p146
        $region38: #{tpu_custom_call.1} parent=35 // pred_check_branch
          %379 = sbr.rel (%p377) target = $region40
        $region39: #{tpu_custom_call.1} parent=35 // pred_region
          %381 = vsyncadd %s368, 0
          %s382 = smul.addr %s27, 2
          %s383 = sadd.s32 %s28, %s382
          %s384 = smul.addr %s383, 4
          %s385 = scalar_lea.hbm %s4, %s384
          %s386 = sshll.u32 %s371, 4
          %s387 = int_to_ptr.vmem [resolvable:$true] %s386
          %s388 = sshll.u32 %s385, 4
          %s389 = int_to_ptr.hbm [resolvable:$true] %s388
          %394 = dma.vmem_to_hbm [thread:$0]  %s387, 128, %s389, %s368, 64, 64, 4
        $region40: #{tpu_custom_call.1} parent=35 // pred_fallthru
          _
        // Predicated region
        $region41: #{tpu_custom_call.1} parent=35 // pred_check
          %p395 = pneg %p174
        $region42: #{tpu_custom_call.1} parent=35 // pred_check_branch
          %397 = sbr.rel (%p395) target = $region44
        $region43: #{tpu_custom_call.1} parent=35 // pred_region
          %399 = vsyncadd %s373, 0
          %s400 = smul.addr %s27, 2
          %s401 = sadd.s32 %s28, %s400
          %s402 = smul.addr %s401, 4
          %s403 = scalar_lea.hbm %s5, %s402
          %s404 = sshll.u32 %s376, 4
          %s405 = int_to_ptr.vmem [resolvable:$true] %s404
          %s406 = sshll.u32 %s403, 4
          %s407 = int_to_ptr.hbm [resolvable:$true] %s406
          %412 = dma.vmem_to_hbm [thread:$0]  %s405, 128, %s407, %s373, 64, 64, 4
        $region44: #{tpu_custom_call.1} parent=35 // pred_fallthru
          _
      $region36: #{tpu_custom_call.1} parent=5 // pred_fallthru
        _
      %p413 = scmp.le.s32.totalorder 2, %s18
      // Predicated region
      $region45: #{tpu_custom_call.1} parent=5 // pred_check
        %p414 = pneg %p413
      $region46: #{tpu_custom_call.1} parent=5 // pred_check_branch
        %416 = sbr.rel (%p414) target = $region48
      $region47: #{tpu_custom_call.1} parent=5 // pred_region
        %s417 = ssub.s32 %s18, 2
        // Predicated region
        $region49: #{tpu_custom_call.1} parent=47 // pred_check
          %p418 = pneg %p152
        $region50: #{tpu_custom_call.1} parent=47 // pred_check_branch
          %420 = sbr.rel (%p418) target = $region52
        $region51: #{tpu_custom_call.1} parent=47 // pred_region
          %s421 = sand.u32 %s137, 1
          %s422 = scalar_lea.sflag [#allocation3], %s421
          %s423 = sand.u32 %s137, 1
          %s424 = smul.addr %s423, 8
          %s425 = scalar_lea.vmem [#allocation2], %s424
          %427 = dma.done %s422, 128
        $region52: #{tpu_custom_call.1} parent=47 // pred_fallthru
          _
        // Predicated region
        $region53: #{tpu_custom_call.1} parent=47 // pred_check
          %p428 = pneg %p180
        $region54: #{tpu_custom_call.1} parent=47 // pred_check_branch
          %430 = sbr.rel (%p428) target = $region56
        $region55: #{tpu_custom_call.1} parent=47 // pred_region
          %s431 = sand.u32 %s165, 1
          %s432 = scalar_lea.sflag [#allocation5], %s431
          %s433 = sand.u32 %s165, 1
          %s434 = smul.addr %s433, 8
          %s435 = scalar_lea.vmem [#allocation4], %s434
          %437 = dma.done %s432, 128
        $region56: #{tpu_custom_call.1} parent=47 // pred_fallthru
          _
      $region48: #{tpu_custom_call.1} parent=5 // pred_fallthru
        _
    $region6: #{tpu_custom_call.1} parent=1 // loop_footer
      %s22 = sadd.s32 1, %s18
    $region7: #{tpu_custom_call.1} parent=1 // loop_footer_branch
      %17 = sbr.rel target = $region3
    $region8: #{tpu_custom_call.1} parent=1 // loop_exit
      _
    %438 = vsyncpa [#allocation3], 1
    %s439 = scalar_lea.sflag [#allocation3], 1
    %440 = vsyncpa %s439, 1
    %441 = vsyncpa [#allocation5], 1
    %s442 = scalar_lea.sflag [#allocation5], 1
    %443 = vsyncpa %s442, 1

</llo_original>
